<compile_context>
chip_gen: v5e
topology: v5e:2x2
jax: 0.10.0
libtpu: 0.0.40
codegen_flags: <defaults>
</compile_context>

<pallas_src>
import functools

import jax
import jax.numpy as jnp
from jax.experimental import pallas as pl
from jax.experimental.pallas import tpu as pltpu


def _round_up(x, m):
    return (x + m - 1) // m * m


# ----------------------------- kernel -----------------------------
def _mmoe_kernel(num_tasks, num_experts,
                 x_ref, w1_ref, b1_ref, wh_ref, bh_ref,
                 wg_ref, bg_ref, rexp_ref, wt_ref, bt_ref, out_ref):
    """Fused MMoE forward for one batch tile (experts packed along lanes)."""
    mm_dtype = w1_ref.dtype            # matmul-operand dtype (f32 or bf16)
    x = x_ref[...]                     # (bm, D_in) float32
    xm = x.astype(mm_dtype)

    # ---- Packed expert stack: (Linear + ReLU) x5, one matmul per layer ----
    # TODO(synk): nn.Dropout(p=0.3) is stochastic in train mode; implemented as
    #             identity (eval-mode semantics).
    h = jnp.dot(xm, w1_ref[...], preferred_element_type=jnp.float32) + b1_ref[...]
    h = jnp.maximum(h, 0.0)            # (bm, E*H) float32
    for l in range(4):                 # short, fixed trip count -> unrolled
        h = (jnp.dot(h.astype(mm_dtype), wh_ref[l],
                     preferred_element_type=jnp.float32) + bh_ref[l])
        h = jnp.maximum(h, 0.0)
    hm = h.astype(mm_dtype)            # hoisted: cast once, reused by all tasks

    # ---- All gate logits in one matmul: (bm, T*E) ----
    logits = (jnp.dot(xm, wg_ref[...], preferred_element_type=jnp.float32)
              + bg_ref[...])
    rexp = rexp_ref[...]               # (E, E*H) 0/1 lane-expansion matrix (f32)

    # ---- Per-task softmax gate, gated mixture, tower (all lane-packed) ----
    E = num_experts
    out = bt_ref[...]                  # (1, O_pad) bias, broadcasts on add
    for i in range(num_tasks):
        lg = logits[:, i * E:(i + 1) * E]
        m = jnp.max(lg, axis=-1, keepdims=True)
        e = jnp.exp(lg - m)
        gate = e * pl.reciprocal(jnp.sum(e, axis=-1, keepdims=True), approx=True)
        # Expand each gate value across its expert's H lanes (tiny MXU op).
        ge = jnp.dot(gate, rexp, preferred_element_type=jnp.float32)    # (bm, E*H)
        mixed = h * ge                                                   # (bm, E*H)
        # Tower weight is pre-tiled over experts and placed into this task's
        # output-column range, so one matmul == gated mixture + tower.
        out = out + jnp.dot((hm * ge.astype(mm_dtype)) if mm_dtype != jnp.float32
                            else mixed,
                            wt_ref[i], preferred_element_type=jnp.float32)
    out_ref[...] = out


# ----------------------------- packing -----------------------------
def pack_params(params, input_size, hidden_size, output_size,
                num_tasks, num_experts, matmul_dtype=jnp.float32):
    """One-time repack of per-expert/per-task weights into lane-packed form."""
    E, H, T = num_experts, hidden_size, num_tasks
    EH = E * H
    D = input_size
    o_total = int(sum(output_size))
    o_pad = max(128, _round_up(o_total, 128))   # lane-dense output block

    # First expert layer packed along lanes: (D, E*H).
    w1p = jnp.transpose(params["w1"], (1, 0, 2)).reshape(D, EH)
    b1p = jnp.transpose(params["b1"], (1, 0, 2)).reshape(1, EH)

    # Hidden layers as block-diagonal (E*H, E*H) matrices, one per layer.
    whp = jnp.zeros((4, EH, EH), jnp.float32)
    for l in range(4):
        for j in range(E):
            whp = whp.at[l, j * H:(j + 1) * H, j * H:(j + 1) * H].set(
                params["wh"][j, l])
    bhp = jnp.transpose(params["bh"], (1, 2, 0, 3)).reshape(4, 1, EH)

    # All gates in one matmul: (D, T*E).
    wgp = jnp.transpose(params["wg"], (1, 0, 2)).reshape(D, T * E)
    bgp = jnp.transpose(params["bg"], (1, 0, 2)).reshape(1, T * E)

    # Gate lane-expansion matrix: rexp[j, j*H:(j+1)*H] = 1 (task independent).
    rexp = jnp.kron(jnp.eye(E, dtype=jnp.float32), jnp.ones((1, H), jnp.float32))

    # Towers: per-task (E*H, O_pad) block; tower weight tiled over experts and
    # written into that task's (non-overlapping) output-column range.
    wtp = jnp.zeros((T, EH, o_pad), jnp.float32)
    btp = jnp.zeros((1, o_pad), jnp.float32)
    offsets, off = [], 0
    for i in range(T):
        oi = int(output_size[i])
        offsets.append(off)
        wtp = wtp.at[i, :, off:off + oi].set(jnp.tile(params["wt"][i], (E, 1)))
        btp = btp.at[0, off:off + oi].set(params["bt"][i][0])
        off += oi

    packed = {
        "w1": w1p.astype(matmul_dtype), "b1": b1p,
        "wh": whp.astype(matmul_dtype), "bh": bhp,
        "wg": wgp.astype(matmul_dtype), "bg": bgp,
        "rexp": rexp,
        "wt": wtp.astype(matmul_dtype), "bt": btp,
    }
    return packed, o_pad, offsets


# ----------------------------- wrapper -----------------------------
def mmoe_forward(x, packed, num_tasks, num_experts, output_size, o_pad, offsets):
    """Run the fused MMoE forward pass; returns a tuple of per-task outputs."""
    B, D = x.shape
    x = x.astype(jnp.float32)

    # Batch-tile heuristic: one sublane-aligned tile up to 512 rows (weights
    # and activations are tiny, so VMEM is not a constraint); for larger
    # batches use 256-row tiles -> BlockSpec pipelining with bounded pad waste.
    if B <= 512:
        bm = _round_up(B, 8)
    else:
        bm = 256
    Bp = _round_up(B, bm)
    if Bp != B:
        x = jnp.pad(x, ((0, Bp - B), (0, 0)))
    nb = Bp // bm

    inputs = [x, packed["w1"], packed["b1"], packed["wh"], packed["bh"],
              packed["wg"], packed["bg"], packed["rexp"],
              packed["wt"], packed["bt"]]

    def full_spec(a):
        nd = a.ndim
        return pl.BlockSpec(a.shape, lambda b, _nd=nd: (0,) * _nd)

    in_specs = ([pl.BlockSpec((bm, D), lambda b: (b, 0))]
                + [full_spec(a) for a in inputs[1:]])

    kernel = functools.partial(_mmoe_kernel, num_tasks, num_experts)
    out = pl.pallas_call(
        kernel,
        out_shape=jax.ShapeDtypeStruct((Bp, o_pad), jnp.float32),
        grid=(nb,),
        in_specs=in_specs,
        out_specs=pl.BlockSpec((bm, o_pad), lambda b: (b, 0)),
        compiler_params=pltpu.CompilerParams(
            dimension_semantics=("parallel",)),
    )(*inputs)

    return tuple(out[:B, offsets[i]:offsets[i] + int(output_size[i])]
                 for i in range(num_tasks))


# ----------------------------- parameter init -----------------------------
def init_params(key, input_size, hidden_size, output_size, num_tasks, num_experts):
    """Deterministic PyTorch-like uniform(-1/sqrt(fan_in), 1/sqrt(fan_in)) init."""
    def lin(k, fan_in, fan_out):
        kw, kb = jax.random.split(k)
        bound = 1.0 / jnp.sqrt(jnp.float32(fan_in))
        w = jax.random.uniform(kw, (fan_in, fan_out), jnp.float32, -bound, bound)
        b = jax.random.uniform(kb, (fan_out,), jnp.float32, -bound, bound)
        return w, b

    keys = jax.random.split(key, num_experts * 5 + num_tasks + num_tasks)
    ki = iter(range(len(keys)))

    w1, b1, wh, bh = [], [], [], []
    for _ in range(num_experts):
        w, b = lin(keys[next(ki)], input_size, hidden_size)
        w1.append(w)
        b1.append(b[None, :])
        wl, bl = [], []
        for _ in range(4):
            w, b = lin(keys[next(ki)], hidden_size, hidden_size)
            wl.append(w)
            bl.append(b[None, :])
        wh.append(jnp.stack(wl))           # (4, H, H)
        bh.append(jnp.stack(bl))           # (4, 1, H)

    wg, bg = [], []
    for _ in range(num_tasks):
        w, b = lin(keys[next(ki)], input_size, num_experts)
        wg.append(w)
        bg.append(b[None, :])

    wt, bt = [], []
    for i in range(num_tasks):
        w, b = lin(keys[next(ki)], hidden_size, output_size[i])
        wt.append(w)
        bt.append(b[None, :])

    return {
        "w1": jnp.stack(w1),   # (E, D_in, H)
        "b1": jnp.stack(b1),   # (E, 1, H)
        "wh": jnp.stack(wh),   # (E, 4, H, H)
        "bh": jnp.stack(bh),   # (E, 4, 1, H)
        "wg": jnp.stack(wg),   # (T, D_in, E)
        "bg": jnp.stack(bg),   # (T, 1, E)
        "wt": wt,              # list of (H, O_i)
        "bt": bt,              # list of (1, O_i)
    }


# ----------------------------- pure-JAX reference -----------------------------
def mmoe_reference(x, params, num_experts, num_tasks):
    expert_out = []
    for j in range(num_experts):
        h = jnp.maximum(x @ params["w1"][j] + params["b1"][j], 0.0)
        for l in range(4):
            h = jnp.maximum(h @ params["wh"][j, l] + params["bh"][j, l], 0.0)
        expert_out.append(h)
    outs = []
    for i in range(num_tasks):
        gate = jax.nn.softmax(x @ params["wg"][i] + params["bg"][i], axis=-1)
        gated = sum(expert_out[j] * gate[:, j:j + 1] for j in range(num_experts))
        outs.append(gated @ params["wt"][i] + params["bt"][i])
    return outs


if __name__ == "__main__":
    # Small shapes consistent with the module's forward pass.
    batch = 8
    input_size = 32
    hidden_size = 32
    num_experts = 4          # E*H = 128 -> exactly one lane-dense vreg width
    num_tasks = 2
    output_size = [16, 16]   # one tower per task (2-D localization grid)

    key = jax.random.PRNGKey(0)
    kx, kp = jax.random.split(key)
    x = jax.random.normal(kx, (batch, input_size), dtype=jnp.float32)
    params = init_params(kp, input_size, hidden_size, output_size,
                         num_tasks, num_experts)

    ref_out = mmoe_reference(x, params, num_experts, num_tasks)

    # --- f32 matmul operands (numerical-parity path, works on all chips) ---
    packed, o_pad, offs = pack_params(params, input_size, hidden_size,
                                      output_size, num_tasks, num_experts,
                                      matmul_dtype=jnp.float32)
    out_f32 = jax.block_until_ready(
        mmoe_forward(x, packed, num_tasks, num_experts, output_size, o_pad, offs))
    for a, b in zip(out_f32, ref_out):
        assert a.shape == b.shape
        assert jnp.allclose(a, b, atol=5e-3, rtol=5e-3), "f32 mismatch vs reference"

    # --- bf16 matmul operands, f32 accumulate (v6e/v7x fast path) ---
    packed_bf16, o_pad, offs = pack_params(params, input_size, hidden_size,
                                           output_size, num_tasks, num_experts,
                                           matmul_dtype=jnp.bfloat16)
    out_bf16 = jax.block_until_ready(
        mmoe_forward(x, packed_bf16, num_tasks, num_experts, output_size,
                     o_pad, offs))
    for a, b in zip(out_bf16, ref_out):
        assert a.shape == b.shape
        assert bool(jnp.all(jnp.isfinite(a)))
        assert jnp.allclose(a, b, atol=1e-1, rtol=1e-1), "bf16 mismatch vs reference"

    print("KERNEL_OK")
</pallas_src>

<mosaic_0001>
module attributes {stable_mosaic.version = 11 : i64} {
  func.func @_mmoe_kernel(%arg0: i32, %arg1: memref<8x32xf32, #tpu.memory_space<vmem>>, %arg2: memref<32x128xf32, #tpu.memory_space<vmem>>, %arg3: memref<1x128xf32, #tpu.memory_space<vmem>>, %arg4: memref<4x128x128xf32, #tpu.memory_space<vmem>>, %arg5: memref<4x1x128xf32, #tpu.memory_space<vmem>>, %arg6: memref<32x8xf32, #tpu.memory_space<vmem>>, %arg7: memref<1x8xf32, #tpu.memory_space<vmem>>, %arg8: memref<4x128xf32, #tpu.memory_space<vmem>>, %arg9: memref<2x128x128xf32, #tpu.memory_space<vmem>>, %arg10: memref<1x128xf32, #tpu.memory_space<vmem>>, %arg11: memref<8x128xf32, #tpu.memory_space<vmem>>) attributes {dimension_semantics = [#tpu.dimension_semantics<parallel>], iteration_bounds = array<i64: 1>, scalar_prefetch = 0 : i64, scratch_operands = 0 : i64, tpu.core_type = #tpu.core_type<tc>, window_params = [{transform_indices = @transform_0, window_bounds = array<i64: 8, 32>}, {pipeline_mode = #tpu.pipeline_mode<synchronous>, transform_indices = @transform_1, window_bounds = array<i64: 32, 128>}, {pipeline_mode = #tpu.pipeline_mode<synchronous>, transform_indices = @transform_2, window_bounds = array<i64: 1, 128>}, {pipeline_mode = #tpu.pipeline_mode<synchronous>, transform_indices = @transform_3, window_bounds = array<i64: 4, 128, 128>}, {pipeline_mode = #tpu.pipeline_mode<synchronous>, transform_indices = @transform_4, window_bounds = array<i64: 4, 1, 128>}, {pipeline_mode = #tpu.pipeline_mode<synchronous>, transform_indices = @transform_5, window_bounds = array<i64: 32, 8>}, {pipeline_mode = #tpu.pipeline_mode<synchronous>, transform_indices = @transform_6, window_bounds = array<i64: 1, 8>}, {pipeline_mode = #tpu.pipeline_mode<synchronous>, transform_indices = @transform_7, window_bounds = array<i64: 4, 128>}, {pipeline_mode = #tpu.pipeline_mode<synchronous>, transform_indices = @transform_8, window_bounds = array<i64: 2, 128, 128>}, {pipeline_mode = #tpu.pipeline_mode<synchronous>, transform_indices = @transform_9, window_bounds = array<i64: 1, 128>}, {transform_indices = @transform_10, window_bounds = array<i64: 8, 128>}]} {
    %c0 = arith.constant 0 : index
    %c0_0 = arith.constant 0 : index
    %0 = vector.load %arg1[%c0, %c0_0] : memref<8x32xf32, #tpu.memory_space<vmem>>, vector<8x32xf32>
    %c0_1 = arith.constant 0 : index
    %c0_2 = arith.constant 0 : index
    %1 = vector.load %arg2[%c0_1, %c0_2] : memref<32x128xf32, #tpu.memory_space<vmem>>, vector<32x128xf32>
    %cst = arith.constant dense<0.000000e+00> : vector<8x128xf32>
    %2 = tpu.matmul %0, %1, %cst {dimension_numbers = #tpu.dot_dimension_numbers<[1], [0], [0], [1], [0, 0, 1, 1], [], []>} : vector<8x32xf32>, vector<32x128xf32>, vector<8x128xf32> -> vector<8x128xf32>
    %c0_3 = arith.constant 0 : index
    %c0_4 = arith.constant 0 : index
    %3 = vector.load %arg3[%c0_3, %c0_4] : memref<1x128xf32, #tpu.memory_space<vmem>>, vector<1x128xf32>
    %4 = vector.broadcast %3 : vector<1x128xf32> to vector<8x128xf32>
    %5 = arith.addf %2, %4 : vector<8x128xf32>
    %cst_5 = arith.constant 0.000000e+00 : f32
    %6 = vector.broadcast %cst_5 : f32 to vector<8x128xf32>
    %7 = arith.maximumf %5, %6 : vector<8x128xf32>
    %c0_6 = arith.constant 0 : index
    %c0_7 = arith.constant 0 : index
    %c0_8 = arith.constant 0 : index
    %8 = vector.load %arg4[%c0_6, %c0_7, %c0_8] : memref<4x128x128xf32, #tpu.memory_space<vmem>>, vector<1x128x128xf32>
    %9 = vector.shape_cast %8 : vector<1x128x128xf32> to vector<128x128xf32>
    %cst_9 = arith.constant dense<0.000000e+00> : vector<8x128xf32>
    %10 = tpu.matmul %7, %9, %cst_9 {dimension_numbers = #tpu.dot_dimension_numbers<[1], [0], [0], [1], [0, 0, 1, 1], [], []>} : vector<8x128xf32>, vector<128x128xf32>, vector<8x128xf32> -> vector<8x128xf32>
    %c0_10 = arith.constant 0 : index
    %c0_11 = arith.constant 0 : index
    %c0_12 = arith.constant 0 : index
    %11 = vector.load %arg5[%c0_10, %c0_11, %c0_12] : memref<4x1x128xf32, #tpu.memory_space<vmem>>, vector<1x1x128xf32>
    %12 = vector.shape_cast %11 : vector<1x1x128xf32> to vector<1x128xf32>
    %13 = vector.broadcast %12 : vector<1x128xf32> to vector<8x128xf32>
    %14 = arith.addf %10, %13 : vector<8x128xf32>
    %cst_13 = arith.constant 0.000000e+00 : f32
    %15 = vector.broadcast %cst_13 : f32 to vector<8x128xf32>
    %16 = arith.maximumf %14, %15 : vector<8x128xf32>
    %c1 = arith.constant 1 : index
    %c0_14 = arith.constant 0 : index
    %c0_15 = arith.constant 0 : index
    %17 = vector.load %arg4[%c1, %c0_14, %c0_15] : memref<4x128x128xf32, #tpu.memory_space<vmem>>, vector<1x128x128xf32>
    %18 = vector.shape_cast %17 : vector<1x128x128xf32> to vector<128x128xf32>
    %cst_16 = arith.constant dense<0.000000e+00> : vector<8x128xf32>
    %19 = tpu.matmul %16, %18, %cst_16 {dimension_numbers = #tpu.dot_dimension_numbers<[1], [0], [0], [1], [0, 0, 1, 1], [], []>} : vector<8x128xf32>, vector<128x128xf32>, vector<8x128xf32> -> vector<8x128xf32>
    %c1_17 = arith.constant 1 : index
    %c0_18 = arith.constant 0 : index
    %c0_19 = arith.constant 0 : index
    %20 = vector.load %arg5[%c1_17, %c0_18, %c0_19] : memref<4x1x128xf32, #tpu.memory_space<vmem>>, vector<1x1x128xf32>
    %21 = vector.shape_cast %20 : vector<1x1x128xf32> to vector<1x128xf32>
    %22 = vector.broadcast %21 : vector<1x128xf32> to vector<8x128xf32>
    %23 = arith.addf %19, %22 : vector<8x128xf32>
    %cst_20 = arith.constant 0.000000e+00 : f32
    %24 = vector.broadcast %cst_20 : f32 to vector<8x128xf32>
    %25 = arith.maximumf %23, %24 : vector<8x128xf32>
    %c2 = arith.constant 2 : index
    %c0_21 = arith.constant 0 : index
    %c0_22 = arith.constant 0 : index
    %26 = vector.load %arg4[%c2, %c0_21, %c0_22] : memref<4x128x128xf32, #tpu.memory_space<vmem>>, vector<1x128x128xf32>
    %27 = vector.shape_cast %26 : vector<1x128x128xf32> to vector<128x128xf32>
    %cst_23 = arith.constant dense<0.000000e+00> : vector<8x128xf32>
    %28 = tpu.matmul %25, %27, %cst_23 {dimension_numbers = #tpu.dot_dimension_numbers<[1], [0], [0], [1], [0, 0, 1, 1], [], []>} : vector<8x128xf32>, vector<128x128xf32>, vector<8x128xf32> -> vector<8x128xf32>
    %c2_24 = arith.constant 2 : index
    %c0_25 = arith.constant 0 : index
    %c0_26 = arith.constant 0 : index
    %29 = vector.load %arg5[%c2_24, %c0_25, %c0_26] : memref<4x1x128xf32, #tpu.memory_space<vmem>>, vector<1x1x128xf32>
    %30 = vector.shape_cast %29 : vector<1x1x128xf32> to vector<1x128xf32>
    %31 = vector.broadcast %30 : vector<1x128xf32> to vector<8x128xf32>
    %32 = arith.addf %28, %31 : vector<8x128xf32>
    %cst_27 = arith.constant 0.000000e+00 : f32
    %33 = vector.broadcast %cst_27 : f32 to vector<8x128xf32>
    %34 = arith.maximumf %32, %33 : vector<8x128xf32>
    %c3 = arith.constant 3 : index
    %c0_28 = arith.constant 0 : index
    %c0_29 = arith.constant 0 : index
    %35 = vector.load %arg4[%c3, %c0_28, %c0_29] : memref<4x128x128xf32, #tpu.memory_space<vmem>>, vector<1x128x128xf32>
    %36 = vector.shape_cast %35 : vector<1x128x128xf32> to vector<128x128xf32>
    %cst_30 = arith.constant dense<0.000000e+00> : vector<8x128xf32>
    %37 = tpu.matmul %34, %36, %cst_30 {dimension_numbers = #tpu.dot_dimension_numbers<[1], [0], [0], [1], [0, 0, 1, 1], [], []>} : vector<8x128xf32>, vector<128x128xf32>, vector<8x128xf32> -> vector<8x128xf32>
    %c3_31 = arith.constant 3 : index
    %c0_32 = arith.constant 0 : index
    %c0_33 = arith.constant 0 : index
    %38 = vector.load %arg5[%c3_31, %c0_32, %c0_33] : memref<4x1x128xf32, #tpu.memory_space<vmem>>, vector<1x1x128xf32>
    %39 = vector.shape_cast %38 : vector<1x1x128xf32> to vector<1x128xf32>
    %40 = vector.broadcast %39 : vector<1x128xf32> to vector<8x128xf32>
    %41 = arith.addf %37, %40 : vector<8x128xf32>
    %cst_34 = arith.constant 0.000000e+00 : f32
    %42 = vector.broadcast %cst_34 : f32 to vector<8x128xf32>
    %43 = arith.maximumf %41, %42 : vector<8x128xf32>
    %c0_35 = arith.constant 0 : index
    %c0_36 = arith.constant 0 : index
    %44 = vector.load %arg6[%c0_35, %c0_36] : memref<32x8xf32, #tpu.memory_space<vmem>>, vector<32x8xf32>
    %cst_37 = arith.constant dense<0.000000e+00> : vector<8x8xf32>
    %45 = tpu.matmul %0, %44, %cst_37 {dimension_numbers = #tpu.dot_dimension_numbers<[1], [0], [0], [1], [0, 0, 1, 1], [], []>} : vector<8x32xf32>, vector<32x8xf32>, vector<8x8xf32> -> vector<8x8xf32>
    %c0_38 = arith.constant 0 : index
    %c0_39 = arith.constant 0 : index
    %46 = vector.load %arg7[%c0_38, %c0_39] : memref<1x8xf32, #tpu.memory_space<vmem>>, vector<1x8xf32>
    %47 = vector.broadcast %46 : vector<1x8xf32> to vector<8x8xf32>
    %48 = arith.addf %45, %47 : vector<8x8xf32>
    %c0_40 = arith.constant 0 : index
    %c0_41 = arith.constant 0 : index
    %49 = vector.load %arg8[%c0_40, %c0_41] : memref<4x128xf32, #tpu.memory_space<vmem>>, vector<4x128xf32>
    %c0_42 = arith.constant 0 : index
    %c0_43 = arith.constant 0 : index
    %50 = vector.load %arg10[%c0_42, %c0_43] : memref<1x128xf32, #tpu.memory_space<vmem>>, vector<1x128xf32>
    %51 = vector.extract_strided_slice %48 {offsets = [0, 0], sizes = [8, 4], strides = [1, 1]} : vector<8x8xf32> to vector<8x4xf32>
    %cst_44 = arith.constant dense<0xFF800000> : vector<8xf32>
    %52 = vector.multi_reduction <maximumf>, %51, %cst_44 [1] : vector<8x4xf32> to vector<8xf32>
    %53 = vector.shape_cast %52 : vector<8xf32> to vector<8x1xf32>
    %54 = vector.broadcast %53 : vector<8x1xf32> to vector<8x4xf32>
    %55 = arith.subf %51, %54 : vector<8x4xf32>
    %56 = math.exp %55 : vector<8x4xf32>
    %cst_45 = arith.constant dense<0.000000e+00> : vector<8xf32>
    %57 = vector.multi_reduction <add>, %56, %cst_45 [1] : vector<8x4xf32> to vector<8xf32>
    %58 = vector.shape_cast %57 : vector<8xf32> to vector<8x1xf32>
    %59 = tpu.reciprocal %58 {approx = true} : vector<8x1xf32> -> vector<8x1xf32>
    %60 = vector.broadcast %59 : vector<8x1xf32> to vector<8x4xf32>
    %61 = arith.mulf %56, %60 : vector<8x4xf32>
    %cst_46 = arith.constant dense<0.000000e+00> : vector<8x128xf32>
    %62 = tpu.matmul %61, %49, %cst_46 {dimension_numbers = #tpu.dot_dimension_numbers<[1], [0], [0], [1], [0, 0, 1, 1], [], []>} : vector<8x4xf32>, vector<4x128xf32>, vector<8x128xf32> -> vector<8x128xf32>
    %63 = arith.mulf %43, %62 : vector<8x128xf32>
    %c0_47 = arith.constant 0 : index
    %c0_48 = arith.constant 0 : index
    %c0_49 = arith.constant 0 : index
    %64 = vector.load %arg9[%c0_47, %c0_48, %c0_49] : memref<2x128x128xf32, #tpu.memory_space<vmem>>, vector<1x128x128xf32>
    %65 = vector.shape_cast %64 : vector<1x128x128xf32> to vector<128x128xf32>
    %cst_50 = arith.constant dense<0.000000e+00> : vector<8x128xf32>
    %66 = tpu.matmul %63, %65, %cst_50 {dimension_numbers = #tpu.dot_dimension_numbers<[1], [0], [0], [1], [0, 0, 1, 1], [], []>} : vector<8x128xf32>, vector<128x128xf32>, vector<8x128xf32> -> vector<8x128xf32>
    %67 = vector.broadcast %50 : vector<1x128xf32> to vector<8x128xf32>
    %68 = arith.addf %67, %66 : vector<8x128xf32>
    %69 = vector.extract_strided_slice %48 {offsets = [0, 4], sizes = [8, 4], strides = [1, 1]} : vector<8x8xf32> to vector<8x4xf32>
    %cst_51 = arith.constant dense<0xFF800000> : vector<8xf32>
    %70 = vector.multi_reduction <maximumf>, %69, %cst_51 [1] : vector<8x4xf32> to vector<8xf32>
    %71 = vector.shape_cast %70 : vector<8xf32> to vector<8x1xf32>
    %72 = vector.broadcast %71 : vector<8x1xf32> to vector<8x4xf32>
    %73 = arith.subf %69, %72 : vector<8x4xf32>
    %74 = math.exp %73 : vector<8x4xf32>
    %cst_52 = arith.constant dense<0.000000e+00> : vector<8xf32>
    %75 = vector.multi_reduction <add>, %74, %cst_52 [1] : vector<8x4xf32> to vector<8xf32>
    %76 = vector.shape_cast %75 : vector<8xf32> to vector<8x1xf32>
    %77 = tpu.reciprocal %76 {approx = true} : vector<8x1xf32> -> vector<8x1xf32>
    %78 = vector.broadcast %77 : vector<8x1xf32> to vector<8x4xf32>
    %79 = arith.mulf %74, %78 : vector<8x4xf32>
    %cst_53 = arith.constant dense<0.000000e+00> : vector<8x128xf32>
    %80 = tpu.matmul %79, %49, %cst_53 {dimension_numbers = #tpu.dot_dimension_numbers<[1], [0], [0], [1], [0, 0, 1, 1], [], []>} : vector<8x4xf32>, vector<4x128xf32>, vector<8x128xf32> -> vector<8x128xf32>
    %81 = arith.mulf %43, %80 : vector<8x128xf32>
    %c1_54 = arith.constant 1 : index
    %c0_55 = arith.constant 0 : index
    %c0_56 = arith.constant 0 : index
    %82 = vector.load %arg9[%c1_54, %c0_55, %c0_56] : memref<2x128x128xf32, #tpu.memory_space<vmem>>, vector<1x128x128xf32>
    %83 = vector.shape_cast %82 : vector<1x128x128xf32> to vector<128x128xf32>
    %cst_57 = arith.constant dense<0.000000e+00> : vector<8x128xf32>
    %84 = tpu.matmul %81, %83, %cst_57 {dimension_numbers = #tpu.dot_dimension_numbers<[1], [0], [0], [1], [0, 0, 1, 1], [], []>} : vector<8x128xf32>, vector<128x128xf32>, vector<8x128xf32> -> vector<8x128xf32>
    %85 = arith.addf %68, %84 : vector<8x128xf32>
    %c0_58 = arith.constant 0 : index
    %c0_59 = arith.constant 0 : index
    %86 = vector.load %arg11[%c0_58, %c0_59] : memref<8x128xf32, #tpu.memory_space<vmem>>, vector<8x128xf32>
    tpu.vector_store %arg11[%c0_58, %c0_59], %85 {strides = array<i32>} : memref<8x128xf32, #tpu.memory_space<vmem>>, vector<8x128xf32>,
    return
  }
  func.func @transform_0(%arg0: i32) -> (i32, i32) {
    %c0_i32 = arith.constant 0 : i32
    %c0_i32_0 = arith.constant 0 : i32
    return %arg0, %c0_i32 : i32, i32
  }
  func.func @transform_1(%arg0: i32) -> (i32, i32) {
    %c0_i32 = arith.constant 0 : i32
    %c0_i32_0 = arith.constant 0 : i32
    %c0_i32_1 = arith.constant 0 : i32
    return %c0_i32, %c0_i32_0 : i32, i32
  }
  func.func @transform_2(%arg0: i32) -> (i32, i32) {
    %c0_i32 = arith.constant 0 : i32
    %c0_i32_0 = arith.constant 0 : i32
    %c0_i32_1 = arith.constant 0 : i32
    return %c0_i32, %c0_i32_0 : i32, i32
  }
  func.func @transform_3(%arg0: i32) -> (i32, i32, i32) {
    %c0_i32 = arith.constant 0 : i32
    %c0_i32_0 = arith.constant 0 : i32
    %c0_i32_1 = arith.constant 0 : i32
    %c0_i32_2 = arith.constant 0 : i32
    return %c0_i32, %c0_i32_0, %c0_i32_1 : i32, i32, i32
  }
  func.func @transform_4(%arg0: i32) -> (i32, i32, i32) {
    %c0_i32 = arith.constant 0 : i32
    %c0_i32_0 = arith.constant 0 : i32
    %c0_i32_1 = arith.constant 0 : i32
    %c0_i32_2 = arith.constant 0 : i32
    return %c0_i32, %c0_i32_0, %c0_i32_1 : i32, i32, i32
  }
  func.func @transform_5(%arg0: i32) -> (i32, i32) {
    %c0_i32 = arith.constant 0 : i32
    %c0_i32_0 = arith.constant 0 : i32
    %c0_i32_1 = arith.constant 0 : i32
    return %c0_i32, %c0_i32_0 : i32, i32
  }
  func.func @transform_6(%arg0: i32) -> (i32, i32) {
    %c0_i32 = arith.constant 0 : i32
    %c0_i32_0 = arith.constant 0 : i32
    %c0_i32_1 = arith.constant 0 : i32
    return %c0_i32, %c0_i32_0 : i32, i32
  }
  func.func @transform_7(%arg0: i32) -> (i32, i32) {
    %c0_i32 = arith.constant 0 : i32
    %c0_i32_0 = arith.constant 0 : i32
    %c0_i32_1 = arith.constant 0 : i32
    return %c0_i32, %c0_i32_0 : i32, i32
  }
  func.func @transform_8(%arg0: i32) -> (i32, i32, i32) {
    %c0_i32 = arith.constant 0 : i32
    %c0_i32_0 = arith.constant 0 : i32
    %c0_i32_1 = arith.constant 0 : i32
    %c0_i32_2 = arith.constant 0 : i32
    return %c0_i32, %c0_i32_0, %c0_i32_1 : i32, i32, i32
  }
  func.func @transform_9(%arg0: i32) -> (i32, i32) {
    %c0_i32 = arith.constant 0 : i32
    %c0_i32_0 = arith.constant 0 : i32
    %c0_i32_1 = arith.constant 0 : i32
    return %c0_i32, %c0_i32_0 : i32, i32
  }
  func.func @transform_10(%arg0: i32) -> (i32, i32) {
    %c0_i32 = arith.constant 0 : i32
    %c0_i32_0 = arith.constant 0 : i32
    return %arg0, %c0_i32 : i32, i32
  }
}

</mosaic_0001>

<llo_original>
// kernel: tpu_custom_call.1
$region0: #{tpu_custom_call.1}
  #allocation0 [shape = 'u32[]', space=smem, size = 0x4, offset = 0x4, fixed_abs, tag = 'smem constant byte address 0x4 - core index']
  #allocation1 [shape = 'u32[72,128]{1,0:T(1,128)}', space=vmem, size = 0x9000, scoped, tag = 'internal scratch']
  %s0 = inlined_call_operand.vmem [shape: f32[8,32], index: 0, kind: input, shape index: {}]
  %s1 = inlined_call_operand.vmem [shape: f32[32,128], index: 1, kind: input, shape index: {}]
  %s2 = inlined_call_operand.hbm [shape: f32[1,128], index: 2, kind: input, shape index: {}]
  %s3 = inlined_call_operand.hbm [shape: f32[4,128,128], index: 3, kind: input, shape index: {}]
  %s4 = inlined_call_operand.hbm [shape: f32[4,1,128], index: 4, kind: input, shape index: {}]
  %s5 = inlined_call_operand.vmem [shape: f32[32,8], index: 5, kind: input, shape index: {}]
  %s6 = inlined_call_operand.vmem [shape: f32[1,8], index: 6, kind: input, shape index: {}]
  %s7 = inlined_call_operand.vmem [shape: f32[4,128], index: 7, kind: input, shape index: {}]
  %s8 = inlined_call_operand.hbm [shape: f32[2,128,128], index: 8, kind: input, shape index: {}]
  %s9 = inlined_call_operand.vmem [shape: f32[1,128], index: 9, kind: input, shape index: {}]
  %s10 = inlined_call_operand.hbm [shape: f32[8,128], index: 10, kind: output, shape index: {}]
  %s11 = sld [smem:[#allocation0]]
  $region66: #{tpu_custom_call.1} parent=0
    _
  %s13 = ssub.s32 1, %s11
  %s14 = scalar_select 0, %s13, %s11
  $region1: #{tpu_custom_call.1} parent=0
    #allocation2 [shape = 'u8[512]{0}', space=vmem, size = 0x400, scoped, tag = 'input window, operand 2, single buffered']
    #allocation3 [shape = 's32[1]{0}', space=sflag, size = 0x4, scoped, tag = 'scoped memory for tpu_custom_call.1']
    #allocation4 [shape = 's32[1]{0}', space=sflag, size = 0x4, scoped, tag = 'scoped memory for tpu_custom_call.1']
    #allocation5 [shape = 'u8[262144]{0}', space=vmem, size = 0x40000, scoped, tag = 'input window, operand 3, single buffered']
    #allocation6 [shape = 's32[1]{0}', space=sflag, size = 0x4, scoped, tag = 'scoped memory for tpu_custom_call.1']
    #allocation7 [shape = 'u8[2048]{0}', space=vmem, size = 0x800, scoped, tag = 'input window, operand 4, single buffered']
    #allocation8 [shape = 'u8[131072]{0}', space=vmem, size = 0x20000, scoped, tag = 'input window, operand 8, single buffered']
    #allocation9 [shape = 's32[1]{0}', space=sflag, size = 0x4, scoped, tag = 'scoped memory for tpu_custom_call.1']
    #allocation10 [shape = 'u8[4096]{0}', space=vmem, size = 0x1000, scoped, tag = 'output window, operand 0, single buffered']
    %15 = vsyncpa [#allocation3], 0
    %16 = vsyncpa [#allocation6], 0
    %17 = vsyncpa [#allocation9], 0
    %18 = vsyncpa [#allocation4], 0
    // Predicated region
    $region2: #{tpu_custom_call.1} parent=1 // pred_check
      _
    $region3: #{tpu_custom_call.1} parent=1 // pred_check_branch
      %20 = sbr.rel (0) target = $region5
    $region4: #{tpu_custom_call.1} parent=1 // pred_region
      _
    $region5: #{tpu_custom_call.1} parent=1 // pred_fallthru
      _
    // Predicated region
    $region6: #{tpu_custom_call.1} parent=1 // pred_check
      _
    $region7: #{tpu_custom_call.1} parent=1 // pred_check_branch
      %22 = sbr.rel (0) target = $region9
    $region8: #{tpu_custom_call.1} parent=1 // pred_region
      _
    $region9: #{tpu_custom_call.1} parent=1 // pred_fallthru
      _
    // Predicated region
    $region10: #{tpu_custom_call.1} parent=1 // pred_check
      _
    $region11: #{tpu_custom_call.1} parent=1 // pred_check_branch
      %24 = sbr.rel (0) target = $region13
    $region12: #{tpu_custom_call.1} parent=1 // pred_region
      %26 = vsyncadd [#allocation3], 0
      %s28 = sshll.u32 %s2, 4
      %s29 = int_to_ptr.hbm [resolvable:$true] %s28
      %s30 = sshll.u32 [#allocation2], 4
      %s31 = int_to_ptr.vmem [resolvable:$true] %s30
      %33 = dma.hbm_to_vmem [thread:$0]  %s29, 16, %s31, [#allocation3]
    $region13: #{tpu_custom_call.1} parent=1 // pred_fallthru
      _
    // Predicated region
    $region14: #{tpu_custom_call.1} parent=1 // pred_check
      _
    $region15: #{tpu_custom_call.1} parent=1 // pred_check_branch
      %35 = sbr.rel (0) target = $region17
    $region16: #{tpu_custom_call.1} parent=1 // pred_region
      %37 = vsyncadd [#allocation6], 0
      %s38 = sshll.u32 %s3, 4
      %s39 = int_to_ptr.hbm [resolvable:$true] %s38
      %s40 = sshll.u32 [#allocation5], 4
      %s41 = int_to_ptr.vmem [resolvable:$true] %s40
      %46 = dma.hbm_to_vmem [thread:$0]  %s39, 8192, %s41, [#allocation6], 128, 128, 8
    $region17: #{tpu_custom_call.1} parent=1 // pred_fallthru
      _
    // Predicated region
    $region18: #{tpu_custom_call.1} parent=1 // pred_check
      _
    $region19: #{tpu_custom_call.1} parent=1 // pred_check_branch
      %48 = sbr.rel (0) target = $region21
    $region20: #{tpu_custom_call.1} parent=1 // pred_region
      %50 = vsyncadd [#allocation6], 0
      %s51 = sshll.u32 %s4, 4
      %s52 = int_to_ptr.hbm [resolvable:$true] %s51
      %s53 = sshll.u32 [#allocation7], 4
      %s54 = int_to_ptr.vmem [resolvable:$true] %s53
      %59 = dma.hbm_to_vmem [thread:$0]  %s52, 64, %s54, [#allocation6], 16, 16, 1
    $region21: #{tpu_custom_call.1} parent=1 // pred_fallthru
      _
    // Predicated region
    $region22: #{tpu_custom_call.1} parent=1 // pred_check
      _
    $region23: #{tpu_custom_call.1} parent=1 // pred_check_branch
      %61 = sbr.rel (0) target = $region25
    $region24: #{tpu_custom_call.1} parent=1 // pred_region
      _
    $region25: #{tpu_custom_call.1} parent=1 // pred_fallthru
      _
    // Predicated region
    $region26: #{tpu_custom_call.1} parent=1 // pred_check
      _
    $region27: #{tpu_custom_call.1} parent=1 // pred_check_branch
      %63 = sbr.rel (0) target = $region29
    $region28: #{tpu_custom_call.1} parent=1 // pred_region
      _
    $region29: #{tpu_custom_call.1} parent=1 // pred_fallthru
      _
    // Predicated region
    $region30: #{tpu_custom_call.1} parent=1 // pred_check
      _
    $region31: #{tpu_custom_call.1} parent=1 // pred_check_branch
      %65 = sbr.rel (0) target = $region33
    $region32: #{tpu_custom_call.1} parent=1 // pred_region
      _
    $region33: #{tpu_custom_call.1} parent=1 // pred_fallthru
      _
    // Predicated region
    $region34: #{tpu_custom_call.1} parent=1 // pred_check
      _
    $region35: #{tpu_custom_call.1} parent=1 // pred_check_branch
      %67 = sbr.rel (0) target = $region37
    $region36: #{tpu_custom_call.1} parent=1 // pred_region
      %69 = vsyncadd [#allocation9], 0
      %s70 = sshll.u32 %s8, 4
      %s71 = int_to_ptr.hbm [resolvable:$true] %s70
      %s72 = sshll.u32 [#allocation8], 4
      %s73 = int_to_ptr.vmem [resolvable:$true] %s72
      %78 = dma.hbm_to_vmem [thread:$0]  %s71, 4096, %s73, [#allocation9], 128, 128, 8
    $region37: #{tpu_custom_call.1} parent=1 // pred_fallthru
      _
    // Predicated region
    $region38: #{tpu_custom_call.1} parent=1 // pred_check
      _
    $region39: #{tpu_custom_call.1} parent=1 // pred_check_branch
      %80 = sbr.rel (0) target = $region41
    $region40: #{tpu_custom_call.1} parent=1 // pred_region
      _
    $region41: #{tpu_custom_call.1} parent=1 // pred_fallthru
      _
    // Predicated region
    $region42: #{tpu_custom_call.1} parent=1 // pred_check
      _
    $region43: #{tpu_custom_call.1} parent=1 // pred_check_branch
      %82 = sbr.rel (0) target = $region45
    $region44: #{tpu_custom_call.1} parent=1 // pred_region
      %84 = dma.done [#allocation3], 16
    $region45: #{tpu_custom_call.1} parent=1 // pred_fallthru
      _
    // Predicated region
    $region46: #{tpu_custom_call.1} parent=1 // pred_check
      _
    $region47: #{tpu_custom_call.1} parent=1 // pred_check_branch
      %86 = sbr.rel (0) target = $region49
    $region48: #{tpu_custom_call.1} parent=1 // pred_region
      %88 = dma.done [#allocation6], 8192
    $region49: #{tpu_custom_call.1} parent=1 // pred_fallthru
      _
    // Predicated region
    $region50: #{tpu_custom_call.1} parent=1 // pred_check
      _
    $region51: #{tpu_custom_call.1} parent=1 // pred_check_branch
      %90 = sbr.rel (0) target = $region53
    $region52: #{tpu_custom_call.1} parent=1 // pred_region
      %92 = dma.done [#allocation6], 64
    $region53: #{tpu_custom_call.1} parent=1 // pred_fallthru
      _
    // Predicated region
    $region54: #{tpu_custom_call.1} parent=1 // pred_check
      _
    $region55: #{tpu_custom_call.1} parent=1 // pred_check_branch
      %94 = sbr.rel (0) target = $region57
    $region56: #{tpu_custom_call.1} parent=1 // pred_region
      %96 = dma.done [#allocation9], 4096
    $region57: #{tpu_custom_call.1} parent=1 // pred_fallthru
      _
    %v97 = vld [vmem:[%s0] sm:$0xff]
    %v98 = vld [vmem:[%s1] sm:$0xff]
    %v99 = vld [vmem:[%s1 + $0x8] sm:$0xff]
    %v100 = vld [vmem:[%s1 + $0x10] sm:$0xff]
    %v101 = vld [vmem:[%s1 + $0x18] sm:$0xff]
    %v102 = vld [vmem:[#allocation2] sm:$0x1]
    %v104 = vperm.slane %v102, 0
    %vm106 = vcmask 261120
    %v108 = vsel %vm106, %v97, 0
    %110 = vmatpush.msra.mxu0 0.0
    %111 = vmatpush.msra.mxu0 0.0
    %112 = vmatpush.msra.mxu0 0.0
    %113 = vmatpush.msra.mxu0 0.0
    %114 = vmatpush.msra.mxu0 0.0
    %115 = vmatpush.msra.mxu0 0.0
    %116 = vmatpush.msra.mxu0 0.0
    %117 = vmatpush.msra.mxu0 0.0
    %118 = vmatpush.msra.mxu0 0.0
    %119 = vmatpush.msra.mxu0 0.0
    %120 = vmatpush.msra.mxu0 0.0
    %121 = vmatpush.msra.mxu0 0.0
    %122 = vmatpush.msra.mxu0 %v101
    %123 = vmatpush.msra.mxu0 %v100
    %124 = vmatpush.msra.mxu0 %v99
    %125 = vmatpush.msra.mxu0 %v98
    %126 = vmatmul.f32.gmra.mxu0 %v108
    %v127 = vpop.f32.mrf.mxu0
    %v128 = vadd.f32 %v104, %v127
    %129 = vdwg.mxu0
    %v130 = vmax.f32 %v128, 0.0
    %v131 = vld [vmem:[#allocation5] sm:$0xff]
    %v132 = vld [vmem:[#allocation5 + $0x8] sm:$0xff]
    %v133 = vld [vmem:[#allocation5 + $0x10] sm:$0xff]
    %v134 = vld [vmem:[#allocation5 + $0x18] sm:$0xff]
    %v135 = vld [vmem:[#allocation5 + $0x20] sm:$0xff]
    %v136 = vld [vmem:[#allocation5 + $0x28] sm:$0xff]
    %v137 = vld [vmem:[#allocation5 + $0x30] sm:$0xff]
    %v138 = vld [vmem:[#allocation5 + $0x38] sm:$0xff]
    %v139 = vld [vmem:[#allocation5 + $0x40] sm:$0xff]
    %v140 = vld [vmem:[#allocation5 + $0x48] sm:$0xff]
    %v141 = vld [vmem:[#allocation5 + $0x50] sm:$0xff]
    %v142 = vld [vmem:[#allocation5 + $0x58] sm:$0xff]
    %v143 = vld [vmem:[#allocation5 + $0x60] sm:$0xff]
    %v144 = vld [vmem:[#allocation5 + $0x68] sm:$0xff]
    %v145 = vld [vmem:[#allocation5 + $0x70] sm:$0xff]
    %v146 = vld [vmem:[#allocation5 + $0x78] sm:$0xff]
    %v147 = vld [vmem:[#allocation7] sm:$0x1]
    %v149 = vperm.slane %v147, 0
    %151 = vmatpush.msra.mxu0 %v146
    %152 = vmatpush.msra.mxu0 %v145
    %153 = vmatpush.msra.mxu0 %v144
    %154 = vmatpush.msra.mxu0 %v143
    %155 = vmatpush.msra.mxu0 %v142
    %156 = vmatpush.msra.mxu0 %v141
    %157 = vmatpush.msra.mxu0 %v140
    %158 = vmatpush.msra.mxu0 %v139
    %159 = vmatpush.msra.mxu0 %v138
    %160 = vmatpush.msra.mxu0 %v137
    %161 = vmatpush.msra.mxu0 %v136
    %162 = vmatpush.msra.mxu0 %v135
    %163 = vmatpush.msra.mxu0 %v134
    %164 = vmatpush.msra.mxu0 %v133
    %165 = vmatpush.msra.mxu0 %v132
    %166 = vmatpush.msra.mxu0 %v131
    %167 = vmatmul.f32.gmra.mxu0 %v130
    %v168 = vpop.f32.mrf.mxu0
    %v169 = vadd.f32 %v149, %v168
    %170 = vdwg.mxu0
    %v171 = vmax.f32 %v169, 0.0
    %s172 = scalar_lea.vmem [#allocation5], 128
    %v173 = vld [vmem:[%s172] sm:$0xff]
    %v174 = vld [vmem:[%s172 + $0x8] sm:$0xff]
    %v175 = vld [vmem:[%s172 + $0x10] sm:$0xff]
    %v176 = vld [vmem:[%s172 + $0x18] sm:$0xff]
    %v177 = vld [vmem:[%s172 + $0x20] sm:$0xff]
    %v178 = vld [vmem:[%s172 + $0x28] sm:$0xff]
    %v179 = vld [vmem:[%s172 + $0x30] sm:$0xff]
    %v180 = vld [vmem:[%s172 + $0x38] sm:$0xff]
    %v181 = vld [vmem:[%s172 + $0x40] sm:$0xff]
    %v182 = vld [vmem:[%s172 + $0x48] sm:$0xff]
    %v183 = vld [vmem:[%s172 + $0x50] sm:$0xff]
    %v184 = vld [vmem:[%s172 + $0x58] sm:$0xff]
    %v185 = vld [vmem:[%s172 + $0x60] sm:$0xff]
    %v186 = vld [vmem:[%s172 + $0x68] sm:$0xff]
    %v187 = vld [vmem:[%s172 + $0x70] sm:$0xff]
    %v188 = vld [vmem:[%s172 + $0x78] sm:$0xff]
    %s189 = scalar_lea.vmem [#allocation7], 1
    %v190 = vld [vmem:[%s189] sm:$0x1]
    %v192 = vperm.slane %v190, 0
    %194 = vmatpush.msra.mxu0 %v188
    %195 = vmatpush.msra.mxu0 %v187
    %196 = vmatpush.msra.mxu0 %v186
    %197 = vmatpush.msra.mxu0 %v185
    %198 = vmatpush.msra.mxu0 %v184
    %199 = vmatpush.msra.mxu0 %v183
    %200 = vmatpush.msra.mxu0 %v182
    %201 = vmatpush.msra.mxu0 %v181
    %202 = vmatpush.msra.mxu0 %v180
    %203 = vmatpush.msra.mxu0 %v179
    %204 = vmatpush.msra.mxu0 %v178
    %205 = vmatpush.msra.mxu0 %v177
    %206 = vmatpush.msra.mxu0 %v176
    %207 = vmatpush.msra.mxu0 %v175
    %208 = vmatpush.msra.mxu0 %v174
    %209 = vmatpush.msra.mxu0 %v173
    %210 = vmatmul.f32.gmra.mxu0 %v171
    %v211 = vpop.f32.mrf.mxu0
    %v212 = vadd.f32 %v192, %v211
    %213 = vdwg.mxu0
    %v214 = vmax.f32 %v212, 0.0
    %s215 = scalar_lea.vmem [#allocation5], 256
    %v216 = vld [vmem:[%s215] sm:$0xff]
    %v217 = vld [vmem:[%s215 + $0x8] sm:$0xff]
    %v218 = vld [vmem:[%s215 + $0x10] sm:$0xff]
    %v219 = vld [vmem:[%s215 + $0x18] sm:$0xff]
    %v220 = vld [vmem:[%s215 + $0x20] sm:$0xff]
    %v221 = vld [vmem:[%s215 + $0x28] sm:$0xff]
    %v222 = vld [vmem:[%s215 + $0x30] sm:$0xff]
    %v223 = vld [vmem:[%s215 + $0x38] sm:$0xff]
    %v224 = vld [vmem:[%s215 + $0x40] sm:$0xff]
    %v225 = vld [vmem:[%s215 + $0x48] sm:$0xff]
    %v226 = vld [vmem:[%s215 + $0x50] sm:$0xff]
    %v227 = vld [vmem:[%s215 + $0x58] sm:$0xff]
    %v228 = vld [vmem:[%s215 + $0x60] sm:$0xff]
    %v229 = vld [vmem:[%s215 + $0x68] sm:$0xff]
    %v230 = vld [vmem:[%s215 + $0x70] sm:$0xff]
    %v231 = vld [vmem:[%s215 + $0x78] sm:$0xff]
    %s232 = scalar_lea.vmem [#allocation7], 2
    %v233 = vld [vmem:[%s232] sm:$0x1]
    %v235 = vperm.slane %v233, 0
    %237 = vmatpush.msra.mxu0 %v231
    %238 = vmatpush.msra.mxu0 %v230
    %239 = vmatpush.msra.mxu0 %v229
    %240 = vmatpush.msra.mxu0 %v228
    %241 = vmatpush.msra.mxu0 %v227
    %242 = vmatpush.msra.mxu0 %v226
    %243 = vmatpush.msra.mxu0 %v225
    %244 = vmatpush.msra.mxu0 %v224
    %245 = vmatpush.msra.mxu0 %v223
    %246 = vmatpush.msra.mxu0 %v222
    %247 = vmatpush.msra.mxu0 %v221
    %248 = vmatpush.msra.mxu0 %v220
    %249 = vmatpush.msra.mxu0 %v219
    %250 = vmatpush.msra.mxu0 %v218
    %251 = vmatpush.msra.mxu0 %v217
    %252 = vmatpush.msra.mxu0 %v216
    %253 = vmatmul.f32.gmra.mxu0 %v214
    %v254 = vpop.f32.mrf.mxu0
    %v255 = vadd.f32 %v235, %v254
    %256 = vdwg.mxu0
    %v257 = vmax.f32 %v255, 0.0
    %s258 = scalar_lea.vmem [#allocation5], 384
    %v259 = vld [vmem:[%s258] sm:$0xff]
    %v260 = vld [vmem:[%s258 + $0x8] sm:$0xff]
    %v261 = vld [vmem:[%s258 + $0x10] sm:$0xff]
    %v262 = vld [vmem:[%s258 + $0x18] sm:$0xff]
    %v263 = vld [vmem:[%s258 + $0x20] sm:$0xff]
    %v264 = vld [vmem:[%s258 + $0x28] sm:$0xff]
    %v265 = vld [vmem:[%s258 + $0x30] sm:$0xff]
    %v266 = vld [vmem:[%s258 + $0x38] sm:$0xff]
    %v267 = vld [vmem:[%s258 + $0x40] sm:$0xff]
    %v268 = vld [vmem:[%s258 + $0x48] sm:$0xff]
    %v269 = vld [vmem:[%s258 + $0x50] sm:$0xff]
    %v270 = vld [vmem:[%s258 + $0x58] sm:$0xff]
    %v271 = vld [vmem:[%s258 + $0x60] sm:$0xff]
    %v272 = vld [vmem:[%s258 + $0x68] sm:$0xff]
    %v273 = vld [vmem:[%s258 + $0x70] sm:$0xff]
    %v274 = vld [vmem:[%s258 + $0x78] sm:$0xff]
    %s275 = scalar_lea.vmem [#allocation7], 3
    %v276 = vld [vmem:[%s275] sm:$0x1]
    %v278 = vperm.slane %v276, 0
    %280 = vmatpush.msra.mxu0 %v274
    %281 = vmatpush.msra.mxu0 %v273
    %282 = vmatpush.msra.mxu0 %v272
    %283 = vmatpush.msra.mxu0 %v271
    %284 = vmatpush.msra.mxu0 %v270
    %285 = vmatpush.msra.mxu0 %v269
    %286 = vmatpush.msra.mxu0 %v268
    %287 = vmatpush.msra.mxu0 %v267
    %288 = vmatpush.msra.mxu0 %v266
    %289 = vmatpush.msra.mxu0 %v265
    %290 = vmatpush.msra.mxu0 %v264
    %291 = vmatpush.msra.mxu0 %v263
    %292 = vmatpush.msra.mxu0 %v262
    %293 = vmatpush.msra.mxu0 %v261
    %294 = vmatpush.msra.mxu0 %v260
    %295 = vmatpush.msra.mxu0 %v259
    %296 = vmatmul.f32.gmra.mxu0 %v257
    %v297 = vpop.f32.mrf.mxu0
    %v298 = vadd.f32 %v278, %v297
    %299 = vdwg.mxu0
    %v300 = vmax.f32 %v298, 0.0
    %v301 = vld [vmem:[%s5] sm:$0xff]
    %v302 = vld [vmem:[%s5 + $0x8] sm:$0xff]
    %v303 = vld [vmem:[%s5 + $0x10] sm:$0xff]
    %v304 = vld [vmem:[%s5 + $0x18] sm:$0xff]
    %v305 = vld [vmem:[%s6] sm:$0x1]
    %v307 = vperm.slane %v305, 0
    %309 = vmatpush.msra.mxu0 0.0
    %310 = vmatpush.msra.mxu0 0.0
    %311 = vmatpush.msra.mxu0 0.0
    %312 = vmatpush.msra.mxu0 0.0
    %313 = vmatpush.msra.mxu0 0.0
    %314 = vmatpush.msra.mxu0 0.0
    %315 = vmatpush.msra.mxu0 0.0
    %316 = vmatpush.msra.mxu0 0.0
    %317 = vmatpush.msra.mxu0 0.0
    %318 = vmatpush.msra.mxu0 0.0
    %319 = vmatpush.msra.mxu0 0.0
    %320 = vmatpush.msra.mxu0 0.0
    %321 = vmatpush.msra.mxu0 %v304
    %322 = vmatpush.msra.mxu0 %v303
    %323 = vmatpush.msra.mxu0 %v302
    %324 = vmatpush.msra.mxu0 %v301
    %325 = vmatmul.f32.gmra.mxu0 %v108
    %v326 = vpop.f32.mrf.mxu0
    %v327 = vadd.f32 %v307, %v326
    %328 = vdwg.mxu0
    %v329 = vld [vmem:[%s7] sm:$0xf]
    %v330 = vld [vmem:[%s9] sm:$0x1]
    %vm331 = vcmask 31744
    %v332 = vsel %vm331, %v327, -inf
    %333 = vmax.xlane.f32.xlu0 %v332
    %v334 = vpop.xlane.xlu0 %333
    %v335 = vsub.f32 %v327, %v334
    %v336 = vmul.f32 %v335, 1.442695
    %v337 = vpow.pop %v336
    %v338 = vsel %vm331, %v337, 0.0
    %339 = vadd.xlane.f32.xlu0 %v338
    %v340 = vpop.xlane.xlu0 %339
    %v341 = vrcp.pop %v340
    %v342 = vmul.f32 %v337, %v341
    %v344 = vsel %vm331, %v342, 0
    %vm346 = vcmask 1043456
    %v348 = vsel %vm346, %v329, 0
    %350 = vmatpush.msra.mxu0 0.0
    %351 = vmatpush.msra.mxu0 0.0
    %352 = vmatpush.msra.mxu0 0.0
    %353 = vmatpush.msra.mxu0 0.0
    %354 = vmatpush.msra.mxu0 0.0
    %355 = vmatpush.msra.mxu0 0.0
    %356 = vmatpush.msra.mxu0 0.0
    %357 = vmatpush.msra.mxu0 0.0
    %358 = vmatpush.msra.mxu0 0.0
    %359 = vmatpush.msra.mxu0 0.0
    %360 = vmatpush.msra.mxu0 0.0
    %361 = vmatpush.msra.mxu0 0.0
    %362 = vmatpush.msra.mxu0 0.0
    %363 = vmatpush.msra.mxu0 0.0
    %364 = vmatpush.msra.mxu0 0.0
    %365 = vmatpush.msra.mxu0 %v348
    %366 = vmatmul.f32.gmra.mxu0 %v344
    %v367 = vpop.f32.mrf.mxu0
    %v368 = vadd.f32 0.0, %v367
    %369 = vdwg.mxu0
    %v370 = vmul.f32 %v300, %v368
    %v371 = vld [vmem:[#allocation8] sm:$0xff]
    %v372 = vld [vmem:[#allocation8 + $0x8] sm:$0xff]
    %v373 = vld [vmem:[#allocation8 + $0x10] sm:$0xff]
    %v374 = vld [vmem:[#allocation8 + $0x18] sm:$0xff]
    %v375 = vld [vmem:[#allocation8 + $0x20] sm:$0xff]
    %v376 = vld [vmem:[#allocation8 + $0x28] sm:$0xff]
    %v377 = vld [vmem:[#allocation8 + $0x30] sm:$0xff]
    %v378 = vld [vmem:[#allocation8 + $0x38] sm:$0xff]
    %v379 = vld [vmem:[#allocation8 + $0x40] sm:$0xff]
    %v380 = vld [vmem:[#allocation8 + $0x48] sm:$0xff]
    %v381 = vld [vmem:[#allocation8 + $0x50] sm:$0xff]
    %v382 = vld [vmem:[#allocation8 + $0x58] sm:$0xff]
    %v383 = vld [vmem:[#allocation8 + $0x60] sm:$0xff]
    %v384 = vld [vmem:[#allocation8 + $0x68] sm:$0xff]
    %v385 = vld [vmem:[#allocation8 + $0x70] sm:$0xff]
    %v386 = vld [vmem:[#allocation8 + $0x78] sm:$0xff]
    %387 = vmatpush.msra.mxu0 %v386
    %388 = vmatpush.msra.mxu0 %v385
    %389 = vmatpush.msra.mxu0 %v384
    %390 = vmatpush.msra.mxu0 %v383
    %391 = vmatpush.msra.mxu0 %v382
    %392 = vmatpush.msra.mxu0 %v381
    %393 = vmatpush.msra.mxu0 %v380
    %394 = vmatpush.msra.mxu0 %v379
    %395 = vmatpush.msra.mxu0 %v378
    %396 = vmatpush.msra.mxu0 %v377
    %397 = vmatpush.msra.mxu0 %v376
    %398 = vmatpush.msra.mxu0 %v375
    %399 = vmatpush.msra.mxu0 %v374
    %400 = vmatpush.msra.mxu0 %v373
    %401 = vmatpush.msra.mxu0 %v372
    %402 = vmatpush.msra.mxu0 %v371
    %403 = vmatmul.f32.gmra.mxu0 %v370
    %v404 = vpop.f32.mrf.mxu0
    %v405 = vadd.f32 0.0, %v404
    %406 = vdwg.mxu0
    %v408 = vperm.slane %v330, 0
    %v410 = vadd.f32 %v408, %v405
    %vm411 = vcmask 64544
    %v412 = vsel %vm411, %v327, -inf
    %413 = vmax.xlane.f32.xlu0 %v412
    %v414 = vpop.xlane.xlu0 %413
    %v415 = vsub.f32 %v327, %v414
    %v416 = vmul.f32 %v415, 1.442695
    %v417 = vpow.pop %v416
    %419 = vrot.lane.b32.xlu0 %v417, 124
    %v420 = vpop.permute.xlu0 %419
    %v422 = vsel %vm331, %v420, 0.0
    %423 = vadd.xlane.f32.xlu0 %v422
    %v424 = vpop.xlane.xlu0 %423
    %v425 = vrcp.pop %v424
    %v426 = vmul.f32 %v417, %v425
    %428 = vrot.lane.b32.xlu0 %v426, 124
    %v429 = vpop.permute.xlu0 %428
    %v430 = vsel %vm331, %v429, 0
    %432 = vmatpush.msra.mxu0 0.0
    %433 = vmatpush.msra.mxu0 0.0
    %434 = vmatpush.msra.mxu0 0.0
    %435 = vmatpush.msra.mxu0 0.0
    %436 = vmatpush.msra.mxu0 0.0
    %437 = vmatpush.msra.mxu0 0.0
    %438 = vmatpush.msra.mxu0 0.0
    %439 = vmatpush.msra.mxu0 0.0
    %440 = vmatpush.msra.mxu0 0.0
    %441 = vmatpush.msra.mxu0 0.0
    %442 = vmatpush.msra.mxu0 0.0
    %443 = vmatpush.msra.mxu0 0.0
    %444 = vmatpush.msra.mxu0 0.0
    %445 = vmatpush.msra.mxu0 0.0
    %446 = vmatpush.msra.mxu0 0.0
    %447 = vmatpush.msra.mxu0 %v348
    %448 = vmatmul.f32.gmra.mxu0 %v430
    %v449 = vpop.f32.mrf.mxu0
    %v450 = vadd.f32 0.0, %v449
    %451 = vdwg.mxu0
    %v452 = vmul.f32 %v300, %v450
    %s453 = scalar_lea.vmem [#allocation8], 128
    %v454 = vld [vmem:[%s453] sm:$0xff]
    %v455 = vld [vmem:[%s453 + $0x8] sm:$0xff]
    %v456 = vld [vmem:[%s453 + $0x10] sm:$0xff]
    %v457 = vld [vmem:[%s453 + $0x18] sm:$0xff]
    %v458 = vld [vmem:[%s453 + $0x20] sm:$0xff]
    %v459 = vld [vmem:[%s453 + $0x28] sm:$0xff]
    %v460 = vld [vmem:[%s453 + $0x30] sm:$0xff]
    %v461 = vld [vmem:[%s453 + $0x38] sm:$0xff]
    %v462 = vld [vmem:[%s453 + $0x40] sm:$0xff]
    %v463 = vld [vmem:[%s453 + $0x48] sm:$0xff]
    %v464 = vld [vmem:[%s453 + $0x50] sm:$0xff]
    %v465 = vld [vmem:[%s453 + $0x58] sm:$0xff]
    %v466 = vld [vmem:[%s453 + $0x60] sm:$0xff]
    %v467 = vld [vmem:[%s453 + $0x68] sm:$0xff]
    %v468 = vld [vmem:[%s453 + $0x70] sm:$0xff]
    %v469 = vld [vmem:[%s453 + $0x78] sm:$0xff]
    %470 = vmatpush.msra.mxu0 %v469
    %471 = vmatpush.msra.mxu0 %v468
    %472 = vmatpush.msra.mxu0 %v467
    %473 = vmatpush.msra.mxu0 %v466
    %474 = vmatpush.msra.mxu0 %v465
    %475 = vmatpush.msra.mxu0 %v464
    %476 = vmatpush.msra.mxu0 %v463
    %477 = vmatpush.msra.mxu0 %v462
    %478 = vmatpush.msra.mxu0 %v461
    %479 = vmatpush.msra.mxu0 %v460
    %480 = vmatpush.msra.mxu0 %v459
    %481 = vmatpush.msra.mxu0 %v458
    %482 = vmatpush.msra.mxu0 %v457
    %483 = vmatpush.msra.mxu0 %v456
    %484 = vmatpush.msra.mxu0 %v455
    %485 = vmatpush.msra.mxu0 %v454
    %486 = vmatmul.f32.gmra.mxu0 %v452
    %v487 = vpop.f32.mrf.mxu0
    %v488 = vadd.f32 0.0, %v487
    %489 = vdwg.mxu0
    %v490 = vadd.f32 %v410, %v488
    %491 = vst [vmem:[#allocation10] sm:$0xff] %v490
    // Predicated region
    $region58: #{tpu_custom_call.1} parent=1 // pred_check
      _
    $region59: #{tpu_custom_call.1} parent=1 // pred_check_branch
      %493 = sbr.rel (0) target = $region61
    $region60: #{tpu_custom_call.1} parent=1 // pred_region
      %495 = vsyncadd [#allocation4], 0
      %s497 = sshll.u32 [#allocation10], 4
      %s498 = int_to_ptr.vmem [resolvable:$true] %s497
      %s499 = sshll.u32 %s10, 4
      %s500 = int_to_ptr.hbm [resolvable:$true] %s499
      %502 = dma.vmem_to_hbm [thread:$0]  %s498, 128, %s500, [#allocation4]
    $region61: #{tpu_custom_call.1} parent=1 // pred_fallthru
      _
    // Predicated region
    $region62: #{tpu_custom_call.1} parent=1 // pred_check
      _
    $region63: #{tpu_custom_call.1} parent=1 // pred_check_branch
      %504 = sbr.rel (0) target = $region65
    $region64: #{tpu_custom_call.1} parent=1 // pred_region
      %506 = dma.done [#allocation4], 128
    $region65: #{tpu_custom_call.1} parent=1 // pred_fallthru
      _
    %507 = vsyncpa [#allocation3], 1
    %508 = vsyncpa [#allocation6], 1
    %509 = vsyncpa [#allocation9], 1
    %510 = vsyncpa [#allocation4], 1

</llo_original>
